<compile_context>
chip_gen: v6e
topology: v6e:2x2x1
jax: 0.10.0
libtpu: 0.0.40
codegen_flags: <defaults>
</compile_context>

<pallas_src>
import math

import jax
import jax.numpy as jnp
from jax.experimental import pallas as pl
from jax.experimental.pallas import tpu as pltpu


def _qk_scores(agt_ref, goals_ref, wq_ref, bq_ref, wk_ref, bk_ref):
    """Shared projection + score computation for one (block_b, M, *) block."""
    Bt, M, C = agt_ref.shape
    _, G, _ = goals_ref.shape
    W = wq_ref.shape[1]

    # q projection: one (Bt*M, C) @ (C, W) MXU matmul; weights are shared across
    # the batch tile and 1/sqrt(W) is already folded into wq/bq by the wrapper.
    if M % 8 == 0:
        agt2 = agt_ref[...].reshape(Bt * M, C)          # major-dim merge (free)
        q = jnp.dot(agt2, wq_ref[...],
                    preferred_element_type=jnp.float32) + bq_ref[...]
        q = q.reshape(Bt, M, W)
    else:
        # Fallback for awkward M (not hit in this demo).
        q = jnp.einsum("bmc,cw->bmw", agt_ref[...], wq_ref[...],
                       preferred_element_type=jnp.float32) + bq_ref[...]

    # k projection: contraction depth is only 2 -> two VPU broadcast-FMAs
    # instead of paying MXU push/pop latency for a rank-2 matmul.
    g = goals_ref[...]                                   # (Bt, G, 2)
    k = (g[:, :, 0:1] * wk_ref[0, :]
         + g[:, :, 1:2] * wk_ref[1, :]
         + bk_ref[0, :])                                 # (Bt, G, W)

    # scores: contract on W directly (no k.T materialization / XLU transpose).
    return jnp.einsum("bmw,bgw->bmg", q, k,
                      preferred_element_type=jnp.float32)  # (Bt, M, G)


def _goal_att_kernel_masked(agt_ref, goals_ref, mask_ref,
                            wq_ref, bq_ref, wk_ref, bk_ref, out_ref):
    scores = _qk_scores(agt_ref, goals_ref, wq_ref, bq_ref, wk_ref, bk_ref)
    invalid = mask_ref[...] != 0                # int8 stream; nonzero == invalid
    x = jnp.where(invalid, jnp.float32(-1e12), scores)
    m = jnp.max(x, axis=-1, keepdims=True)
    e = jnp.exp(x - m)
    s = jnp.sum(e, axis=-1, keepdims=True)
    attn = e * pl.reciprocal(s, approx=True)    # EUP vrcp: own bundle slot
    # softmax(masked) * (1 - mask)  ==  zero the invalid entries.
    out_ref[...] = jnp.where(invalid, jnp.float32(0.0), attn).astype(out_ref.dtype)


def _goal_att_kernel_nomask(agt_ref, goals_ref,
                            wq_ref, bq_ref, wk_ref, bk_ref, out_ref):
    scores = _qk_scores(agt_ref, goals_ref, wq_ref, bq_ref, wk_ref, bk_ref)
    m = jnp.max(scores, axis=-1, keepdims=True)
    e = jnp.exp(scores - m)
    s = jnp.sum(e, axis=-1, keepdims=True)
    out_ref[...] = (e * pl.reciprocal(s, approx=True)).astype(out_ref.dtype)


def _pick_block_b(B, M):
    """Batch tile: target ~256 MXU rows per step (v6e/v7x; >=128 also covers
    v5e) but keep >=2 grid steps when possible so both v7x TensorCores get work."""
    bt = max(1, min(B, 256 // max(M, 1)))
    if bt >= B and B > 1:
        bt = (B + 1) // 2
    return bt


def goal_att_forward(agt_emb, goals, params, valid_mask=None, *, block_b=None):
    """agt_emb: (B,M,C) f32; goals: (B,G,2) f32; valid_mask: (B,M,G) bool/int8 or None."""
    B, M, C = agt_emb.shape
    _, G, _ = goals.shape
    W = params["wq"].shape[1]

    # Fold the 1/sqrt(W) score scale into the q projection (one-time, free).
    inv_sqrt_w = 1.0 / math.sqrt(W)
    wq = (params["wq"] * inv_sqrt_w).astype(jnp.float32)               # (C, W)
    bq = (params["bq"] * inv_sqrt_w).reshape(1, W).astype(jnp.float32)  # (1, W)
    wk = params["wk"].astype(jnp.float32)                              # (2, W)
    bk = params["bk"].reshape(1, W).astype(jnp.float32)                # (1, W)

    if block_b is None:
        block_b = _pick_block_b(B, M)
    block_b = max(1, min(block_b, B))
    nblk = pl.cdiv(B, block_b)
    Bp = nblk * block_b

    agt = agt_emb.astype(jnp.float32)
    gls = goals.astype(jnp.float32)
    mask = None
    if valid_mask is not None:
        mask = valid_mask.astype(jnp.int8)   # 1-byte mask stream (4x < f32)

    if Bp != B:  # pad batch to a multiple of the batch tile (sliced off below)
        pad = Bp - B
        agt = jnp.pad(agt, ((0, pad), (0, 0), (0, 0)))
        gls = jnp.pad(gls, ((0, pad), (0, 0), (0, 0)))
        if mask is not None:
            mask = jnp.pad(mask, ((0, pad), (0, 0), (0, 0)))

    # Blocks here are tiny; explicit VMEM limit with headroom under v7x's 64 MiB.
    compiler_params = pltpu.CompilerParams(
        dimension_semantics=("parallel",),
        vmem_limit_bytes=48 * 1024 * 1024,
    )

    def batch_spec(shape):
        return pl.BlockSpec(shape, lambda i: (i, 0, 0))

    weight_specs = [
        pl.BlockSpec((C, W), lambda i: (0, 0)),   # wq (pre-scaled)
        pl.BlockSpec((1, W), lambda i: (0, 0)),   # bq (pre-scaled)
        pl.BlockSpec((2, W), lambda i: (0, 0)),   # wk
        pl.BlockSpec((1, W), lambda i: (0, 0)),   # bk
    ]
    out_spec = pl.BlockSpec((block_b, M, G), lambda i: (i, 0, 0))
    out_shape = jax.ShapeDtypeStruct((Bp, M, G), jnp.float32)

    if mask is None:
        out = pl.pallas_call(
            _goal_att_kernel_nomask,
            out_shape=out_shape,
            grid_spec=pltpu.PrefetchScalarGridSpec(
                num_scalar_prefetch=0,
                grid=(nblk,),
                in_specs=[batch_spec((block_b, M, C)),
                          batch_spec((block_b, G, 2))] + weight_specs,
                out_specs=out_spec),
            compiler_params=compiler_params,
        )(agt, gls, wq, bq, wk, bk)
    else:
        out = pl.pallas_call(
            _goal_att_kernel_masked,
            out_shape=out_shape,
            grid_spec=pltpu.PrefetchScalarGridSpec(
                num_scalar_prefetch=0,
                grid=(nblk,),
                in_specs=[batch_spec((block_b, M, C)),
                          batch_spec((block_b, G, 2)),
                          batch_spec((block_b, M, G))] + weight_specs,
                out_specs=out_spec),
            compiler_params=compiler_params,
        )(agt, gls, mask, wq, bq, wk, bk)

    return out[:B] if Bp != B else out


def init_params(key, in_channels, global_graph_width):
    """Deterministic init mimicking nn.Linear (uniform +/- 1/sqrt(fan_in))."""
    k1, k2, k3, k4 = jax.random.split(key, 4)
    bq_bound = 1.0 / math.sqrt(in_channels)
    bk_bound = 1.0 / math.sqrt(2.0)
    # Stored pre-transposed: wq = q_lin.weight.T -> (C, W); wk = k_lin.weight.T -> (2, W)
    wq = jax.random.uniform(k1, (in_channels, global_graph_width),
                            jnp.float32, -bq_bound, bq_bound)
    bq = jax.random.uniform(k2, (global_graph_width,),
                            jnp.float32, -bq_bound, bq_bound)
    wk = jax.random.uniform(k3, (2, global_graph_width),
                            jnp.float32, -bk_bound, bk_bound)
    bk = jax.random.uniform(k4, (global_graph_width,),
                            jnp.float32, -bk_bound, bk_bound)
    return {"wq": wq, "bq": bq, "wk": wk, "bk": bk}


def goal_att_reference(agt_emb, goals, params, valid_mask=None):
    """Pure-JAX reference matching the PyTorch forward."""
    W = params["wq"].shape[1]
    q = agt_emb @ params["wq"] + params["bq"]
    k = goals @ params["wk"] + params["bk"]
    scores = jnp.einsum("bmw,bgw->bmg", q, k) / math.sqrt(W)
    if valid_mask is not None:
        mf = valid_mask.astype(jnp.float32)
        x = jnp.where(valid_mask, -1e12, scores)
        return jax.nn.softmax(x, axis=-1) * (1.0 - mf)
    return jax.nn.softmax(scores, axis=-1)


if __name__ == "__main__":
    B, M, C, G, W = 8, 8, 32, 16, 32

    key = jax.random.PRNGKey(0)
    k_p, k_a, k_g, k_m = jax.random.split(key, 4)

    params = init_params(k_p, in_channels=C, global_graph_width=W)
    agt_emb = jax.random.normal(k_a, (B, M, C), dtype=jnp.float32)
    goals = jax.random.normal(k_g, (B, G, 2), dtype=jnp.float32)
    valid_mask = jax.random.bernoulli(k_m, p=0.25, shape=(B, M, G))  # True = invalid
    valid_mask = valid_mask.at[0, 0, :].set(True)  # exercise fully-masked row

    # Attention weights are in [0, 1]; 2e-3 tolerance absorbs the approx (EUP
    # vrcp) reciprocal while still catching any structural/masking error.
    tol = dict(atol=2e-3, rtol=2e-3)

    out = jax.block_until_ready(goal_att_forward(agt_emb, goals, params, valid_mask))
    ref = goal_att_reference(agt_emb, goals, params, valid_mask)
    assert out.shape == (B, M, G)
    assert jnp.allclose(out, ref, **tol), "mismatch vs reference (masked)"

    out_nm = jax.block_until_ready(goal_att_forward(agt_emb, goals, params, None))
    ref_nm = goal_att_reference(agt_emb, goals, params, None)
    assert jnp.allclose(out_nm, ref_nm, **tol), "mismatch vs reference (no mask)"

    # Ragged batch size (exercises the batch-padding path).
    out_r = jax.block_until_ready(
        goal_att_forward(agt_emb[:3], goals[:3], params, valid_mask[:3]))
    ref_r = goal_att_reference(agt_emb[:3], goals[:3], params, valid_mask[:3])
    assert jnp.allclose(out_r, ref_r, **tol), "mismatch vs reference (padded batch)"

    print("KERNEL_OK")
</pallas_src>

<mosaic_0001>
module attributes {stable_mosaic.version = 11 : i64} {
  func.func @_goal_att_kernel_masked(%arg0: i32, %arg1: memref<4x8x32xf32, #tpu.memory_space<vmem>>, %arg2: memref<4x16x2xf32, #tpu.memory_space<vmem>>, %arg3: memref<4x8x16xi8, #tpu.memory_space<vmem>>, %arg4: memref<32x32xf32, #tpu.memory_space<vmem>>, %arg5: memref<1x32xf32, #tpu.memory_space<vmem>>, %arg6: memref<2x32xf32, #tpu.memory_space<vmem>>, %arg7: memref<1x32xf32, #tpu.memory_space<vmem>>, %arg8: memref<4x8x16xf32, #tpu.memory_space<vmem>>) attributes {dimension_semantics = [#tpu.dimension_semantics<parallel>], iteration_bounds = array<i64: 2>, scalar_prefetch = 0 : i64, scratch_operands = 0 : i64, tpu.core_type = #tpu.core_type<tc>, window_params = [{transform_indices = @transform_0, window_bounds = array<i64: 4, 8, 32>}, {transform_indices = @transform_1, window_bounds = array<i64: 4, 16, 2>}, {transform_indices = @transform_2, window_bounds = array<i64: 4, 8, 16>}, {pipeline_mode = #tpu.pipeline_mode<synchronous>, transform_indices = @transform_3, window_bounds = array<i64: 32, 32>}, {pipeline_mode = #tpu.pipeline_mode<synchronous>, transform_indices = @transform_4, window_bounds = array<i64: 1, 32>}, {pipeline_mode = #tpu.pipeline_mode<synchronous>, transform_indices = @transform_5, window_bounds = array<i64: 2, 32>}, {pipeline_mode = #tpu.pipeline_mode<synchronous>, transform_indices = @transform_6, window_bounds = array<i64: 1, 32>}, {transform_indices = @transform_7, window_bounds = array<i64: 4, 8, 16>}]} {
    %c0 = arith.constant 0 : index
    %c0_0 = arith.constant 0 : index
    %c0_1 = arith.constant 0 : index
    %0 = vector.load %arg1[%c0, %c0_0, %c0_1] : memref<4x8x32xf32, #tpu.memory_space<vmem>>, vector<4x8x32xf32>
    %1 = vector.shape_cast %0 : vector<4x8x32xf32> to vector<32x32xf32>
    %c0_2 = arith.constant 0 : index
    %c0_3 = arith.constant 0 : index
    %2 = vector.load %arg4[%c0_2, %c0_3] : memref<32x32xf32, #tpu.memory_space<vmem>>, vector<32x32xf32>
    %cst = arith.constant dense<0.000000e+00> : vector<32x32xf32>
    %3 = tpu.matmul %1, %2, %cst {dimension_numbers = #tpu.dot_dimension_numbers<[1], [0], [0], [1], [0, 0, 1, 1], [], []>} : vector<32x32xf32>, vector<32x32xf32>, vector<32x32xf32> -> vector<32x32xf32>
    %c0_4 = arith.constant 0 : index
    %c0_5 = arith.constant 0 : index
    %4 = vector.load %arg5[%c0_4, %c0_5] : memref<1x32xf32, #tpu.memory_space<vmem>>, vector<1x32xf32>
    %5 = vector.broadcast %4 : vector<1x32xf32> to vector<32x32xf32>
    %6 = arith.addf %3, %5 : vector<32x32xf32>
    %7 = vector.shape_cast %6 : vector<32x32xf32> to vector<4x8x32xf32>
    %c0_6 = arith.constant 0 : index
    %c0_7 = arith.constant 0 : index
    %c0_8 = arith.constant 0 : index
    %8 = vector.load %arg2[%c0_6, %c0_7, %c0_8] : memref<4x16x2xf32, #tpu.memory_space<vmem>>, vector<4x16x2xf32>
    %9 = vector.extract_strided_slice %8 {offsets = [0, 0, 0], sizes = [4, 16, 1], strides = [1, 1, 1]} : vector<4x16x2xf32> to vector<4x16x1xf32>
    %c0_9 = arith.constant 0 : index
    %c0_10 = arith.constant 0 : index
    %10 = vector.load %arg6[%c0_9, %c0_10] : memref<2x32xf32, #tpu.memory_space<vmem>>, vector<1x32xf32>
    %11 = vector.shape_cast %10 : vector<1x32xf32> to vector<32xf32>
    %12 = vector.shape_cast %11 : vector<32xf32> to vector<1x1x32xf32>
    %13 = vector.broadcast %9 : vector<4x16x1xf32> to vector<4x16x32xf32>
    %14 = vector.broadcast %12 : vector<1x1x32xf32> to vector<4x16x32xf32>
    %15 = arith.mulf %13, %14 : vector<4x16x32xf32>
    %16 = vector.extract_strided_slice %8 {offsets = [0, 0, 1], sizes = [4, 16, 1], strides = [1, 1, 1]} : vector<4x16x2xf32> to vector<4x16x1xf32>
    %c1 = arith.constant 1 : index
    %c0_11 = arith.constant 0 : index
    %17 = vector.load %arg6[%c1, %c0_11] : memref<2x32xf32, #tpu.memory_space<vmem>>, vector<1x32xf32>
    %18 = vector.shape_cast %17 : vector<1x32xf32> to vector<32xf32>
    %19 = vector.shape_cast %18 : vector<32xf32> to vector<1x1x32xf32>
    %20 = vector.broadcast %16 : vector<4x16x1xf32> to vector<4x16x32xf32>
    %21 = vector.broadcast %19 : vector<1x1x32xf32> to vector<4x16x32xf32>
    %22 = arith.mulf %20, %21 : vector<4x16x32xf32>
    %23 = arith.addf %15, %22 : vector<4x16x32xf32>
    %c0_12 = arith.constant 0 : index
    %c0_13 = arith.constant 0 : index
    %24 = vector.load %arg7[%c0_12, %c0_13] : memref<1x32xf32, #tpu.memory_space<vmem>>, vector<1x32xf32>
    %25 = vector.shape_cast %24 : vector<1x32xf32> to vector<32xf32>
    %26 = vector.shape_cast %25 : vector<32xf32> to vector<1x1x32xf32>
    %27 = vector.broadcast %26 : vector<1x1x32xf32> to vector<4x16x32xf32>
    %28 = arith.addf %23, %27 : vector<4x16x32xf32>
    "tpu.trace_start"() <{level = 10 : i32, message = "bmw,bgw->bmg"}> : () -> ()
    %cst_14 = arith.constant dense<0.000000e+00> : vector<4x8x16xf32>
    %29 = tpu.matmul %7, %28, %cst_14 {dimension_numbers = #tpu.dot_dimension_numbers<[2], [2], [1], [1], [0, 0, 0, 1, 1, 1], [0], [0]>} : vector<4x8x32xf32>, vector<4x16x32xf32>, vector<4x8x16xf32> -> vector<4x8x16xf32>
    "tpu.trace_stop"() : () -> ()
    %c0_15 = arith.constant 0 : index
    %c0_16 = arith.constant 0 : index
    %c0_17 = arith.constant 0 : index
    %30 = vector.load %arg3[%c0_15, %c0_16, %c0_17] : memref<4x8x16xi8, #tpu.memory_space<vmem>>, vector<4x8x16xi8>
    %c0_i8 = arith.constant 0 : i8
    %31 = vector.broadcast %c0_i8 : i8 to vector<4x8x16xi8>
    %32 = arith.cmpi ne, %30, %31 : vector<4x8x16xi8>
    %cst_18 = arith.constant -9.99999995E+11 : f32
    %33 = vector.broadcast %cst_18 : f32 to vector<4x8x16xf32>
    %34 = arith.select %32, %33, %29 : vector<4x8x16xi1>, vector<4x8x16xf32>
    %cst_19 = arith.constant dense<0xFF800000> : vector<4x8xf32>
    %35 = vector.multi_reduction <maximumf>, %34, %cst_19 [2] : vector<4x8x16xf32> to vector<4x8xf32>
    %36 = vector.shape_cast %35 : vector<4x8xf32> to vector<4x8x1xf32>
    %37 = vector.broadcast %36 : vector<4x8x1xf32> to vector<4x8x16xf32>
    %38 = arith.subf %34, %37 : vector<4x8x16xf32>
    %39 = math.exp %38 : vector<4x8x16xf32>
    %cst_20 = arith.constant dense<0.000000e+00> : vector<4x8xf32>
    %40 = vector.multi_reduction <add>, %39, %cst_20 [2] : vector<4x8x16xf32> to vector<4x8xf32>
    %41 = vector.shape_cast %40 : vector<4x8xf32> to vector<4x8x1xf32>
    %42 = tpu.reciprocal %41 {approx = true} : vector<4x8x1xf32> -> vector<4x8x1xf32>
    %43 = vector.broadcast %42 : vector<4x8x1xf32> to vector<4x8x16xf32>
    %44 = arith.mulf %39, %43 : vector<4x8x16xf32>
    %cst_21 = arith.constant 0.000000e+00 : f32
    %45 = vector.broadcast %cst_21 : f32 to vector<4x8x16xf32>
    %46 = arith.select %32, %45, %44 : vector<4x8x16xi1>, vector<4x8x16xf32>
    %c0_22 = arith.constant 0 : index
    %c0_23 = arith.constant 0 : index
    %c0_24 = arith.constant 0 : index
    %47 = vector.load %arg8[%c0_22, %c0_23, %c0_24] : memref<4x8x16xf32, #tpu.memory_space<vmem>>, vector<4x8x16xf32>
    tpu.vector_store %arg8[%c0_22, %c0_23, %c0_24], %46 {strides = array<i32>} : memref<4x8x16xf32, #tpu.memory_space<vmem>>, vector<4x8x16xf32>,
    return
  }
  func.func @transform_0(%arg0: i32) -> (i32, i32, i32) {
    %c0_i32 = arith.constant 0 : i32
    %c0_i32_0 = arith.constant 0 : i32
    %c0_i32_1 = arith.constant 0 : i32
    return %arg0, %c0_i32, %c0_i32_0 : i32, i32, i32
  }
  func.func @transform_1(%arg0: i32) -> (i32, i32, i32) {
    %c0_i32 = arith.constant 0 : i32
    %c0_i32_0 = arith.constant 0 : i32
    %c0_i32_1 = arith.constant 0 : i32
    return %arg0, %c0_i32, %c0_i32_0 : i32, i32, i32
  }
  func.func @transform_2(%arg0: i32) -> (i32, i32, i32) {
    %c0_i32 = arith.constant 0 : i32
    %c0_i32_0 = arith.constant 0 : i32
    %c0_i32_1 = arith.constant 0 : i32
    return %arg0, %c0_i32, %c0_i32_0 : i32, i32, i32
  }
  func.func @transform_3(%arg0: i32) -> (i32, i32) {
    %c0_i32 = arith.constant 0 : i32
    %c0_i32_0 = arith.constant 0 : i32
    %c0_i32_1 = arith.constant 0 : i32
    return %c0_i32, %c0_i32_0 : i32, i32
  }
  func.func @transform_4(%arg0: i32) -> (i32, i32) {
    %c0_i32 = arith.constant 0 : i32
    %c0_i32_0 = arith.constant 0 : i32
    %c0_i32_1 = arith.constant 0 : i32
    return %c0_i32, %c0_i32_0 : i32, i32
  }
  func.func @transform_5(%arg0: i32) -> (i32, i32) {
    %c0_i32 = arith.constant 0 : i32
    %c0_i32_0 = arith.constant 0 : i32
    %c0_i32_1 = arith.constant 0 : i32
    return %c0_i32, %c0_i32_0 : i32, i32
  }
  func.func @transform_6(%arg0: i32) -> (i32, i32) {
    %c0_i32 = arith.constant 0 : i32
    %c0_i32_0 = arith.constant 0 : i32
    %c0_i32_1 = arith.constant 0 : i32
    return %c0_i32, %c0_i32_0 : i32, i32
  }
  func.func @transform_7(%arg0: i32) -> (i32, i32, i32) {
    %c0_i32 = arith.constant 0 : i32
    %c0_i32_0 = arith.constant 0 : i32
    %c0_i32_1 = arith.constant 0 : i32
    return %arg0, %c0_i32, %c0_i32_0 : i32, i32, i32
  }
}

</mosaic_0001>

<llo_original>
// kernel: tpu_custom_call.1
$region0: #{tpu_custom_call.1}
  #allocation0 [shape = 'u32[]', space=smem, size = 0x4, offset = 0x4, fixed_abs, tag = 'smem constant byte address 0x4 - core index']
  #allocation1 [shape = 'u32[144,128]{1,0:T(1,128)}', space=vmem, size = 0x12000, scoped, tag = 'internal scratch']
  %s0 = inlined_call_operand.vmem [shape: f32[8,8,32], index: 0, kind: input, shape index: {}]
  %s1 = inlined_call_operand.vmem [shape: f32[8,16,2], index: 1, kind: input, shape index: {}]
  %s2 = inlined_call_operand.vmem [shape: s8[8,8,16], index: 2, kind: input, shape index: {}]
  %s3 = inlined_call_operand.vmem [shape: f32[32,32], index: 3, kind: input, shape index: {}]
  %s4 = inlined_call_operand.vmem [shape: f32[1,32], index: 4, kind: input, shape index: {}]
  %s5 = inlined_call_operand.vmem [shape: f32[2,32], index: 5, kind: input, shape index: {}]
  %s6 = inlined_call_operand.vmem [shape: f32[1,32], index: 6, kind: input, shape index: {}]
  %s7 = inlined_call_operand.hbm [shape: f32[8,8,16], index: 7, kind: output, shape index: {}]
  %s8 = sld [smem:[#allocation0]]
  $region61: #{tpu_custom_call.1} parent=0
    _
  %s10 = ssub.s32 1, %s8
  %s11 = scalar_select 0, %s10, %s8
  $region1: #{tpu_custom_call.1} parent=0
    #allocation2 [shape = 'u8[32768]{0}', space=vmem, size = 0x8000, scoped, tag = 'output window, operand 0']
    #allocation3 [shape = 's32[2]{0}', space=sflag, size = 0x8, scoped, tag = 'scoped memory for tpu_custom_call.1']
    %12 = vsyncpa [#allocation3], 0
    %s13 = scalar_lea.sflag [#allocation3], 1
    %14 = vsyncpa %s13, 0
    loop: start=0, step=1, limit=4
    $region2: #{tpu_custom_call.1} parent=1 // loop_pre_header
      _
    $region3: #{tpu_custom_call.1} parent=1 // loop_header
      %s16 = sphi 0, %s20
      %p17 = scmp.ge.s32.totalorder %s16, 4
      %s26 = sphi 0, %s28
      %s29 = sphi 0, %s26
      %s30 = sphi 0, %s29
      %s46 = sphi 0, %s30
      %s52 = sphi 0, %s54
      %s55 = sphi 0, %s52
      %s56 = sphi 0, %s55
      %s72 = sphi 0, %s56
      %s78 = sphi 0, %s80
      %s81 = sphi 0, %s78
      %s82 = sphi 0, %s81
      %s98 = sphi 0, %s82
      %s102 = sphi 0, %s102
      %s104 = sphi 0, %s102
      %s105 = sphi 0, %s104
      %s119 = sphi 0, %s105
      %s123 = sphi 0, %s123
      %s125 = sphi 0, %s123
      %s126 = sphi 0, %s125
      %s140 = sphi 0, %s126
      %s144 = sphi 0, %s144
      %s146 = sphi 0, %s144
      %s147 = sphi 0, %s146
      %s161 = sphi 0, %s147
      %s165 = sphi 0, %s165
      %s167 = sphi 0, %s165
      %s168 = sphi 0, %s167
      %s182 = sphi 0, %s168
      %s188 = sphi 0, %s190
      %s191 = sphi 0, %s188
      %s192 = sphi 0, %s191
      %s208 = sphi 0, %s192
    $region4: #{tpu_custom_call.1} parent=1 // loop_header_branch
      %19 = sbr.rel (%p17) target = $region8
    $region5: #{tpu_custom_call.1} parent=1 // loop_body
      %s21 = ssub.s32 %s16, 1
      %s22 = ssub.s32 %s16, 2
      %s23 = sadd.s32 %s16, 1
      %s24 = ssub.s32 %s16, %s23
      %p25 = scmp.eq.s32.totalorder %s24, 0
      %s27 = sadd.s32 %s26, 1
      %s28 = scalar_select %p25, %s26, %s27
      %p31 = pneg %p25
      %p32 = scmp.eq.s32.totalorder %s16, 1
      %p33 = por %p31, %p32
      %p34 = scmp.ne.s32.totalorder %s26, %s29
      %p35 = scmp.eq.s32.totalorder %s16, 0
      %p36 = por %p34, %p35
      %p37 = scmp.ne.s32.totalorder %s26, %s29
      %p38 = scmp.eq.s32.totalorder %s21, 1
      %p39 = por %p37, %p38
      %p40 = scmp.ne.s32.totalorder %s29, %s30
      %p41 = scmp.eq.s32.totalorder %s21, 0
      %p42 = por %p40, %p41
      %p43 = scmp.ne.s32.totalorder %s29, %s30
      %p44 = scmp.eq.s32.totalorder %s22, 1
      %p45 = por %p43, %p44
      %p47 = scmp.ne.s32.totalorder %s30, %s46
      %p48 = scmp.eq.s32.totalorder %s22, 0
      %p49 = por %p47, %p48
      %s50 = ssub.s32 %s16, %s23
      %p51 = scmp.eq.s32.totalorder %s50, 0
      %s53 = sadd.s32 %s52, 1
      %s54 = scalar_select %p51, %s52, %s53
      %p57 = pneg %p51
      %p58 = scmp.eq.s32.totalorder %s16, 1
      %p59 = por %p57, %p58
      %p60 = scmp.ne.s32.totalorder %s52, %s55
      %p61 = scmp.eq.s32.totalorder %s16, 0
      %p62 = por %p60, %p61
      %p63 = scmp.ne.s32.totalorder %s52, %s55
      %p64 = scmp.eq.s32.totalorder %s21, 1
      %p65 = por %p63, %p64
      %p66 = scmp.ne.s32.totalorder %s55, %s56
      %p67 = scmp.eq.s32.totalorder %s21, 0
      %p68 = por %p66, %p67
      %p69 = scmp.ne.s32.totalorder %s55, %s56
      %p70 = scmp.eq.s32.totalorder %s22, 1
      %p71 = por %p69, %p70
      %p73 = scmp.ne.s32.totalorder %s56, %s72
      %p74 = scmp.eq.s32.totalorder %s22, 0
      %p75 = por %p73, %p74
      %s76 = ssub.s32 %s16, %s23
      %p77 = scmp.eq.s32.totalorder %s76, 0
      %s79 = sadd.s32 %s78, 1
      %s80 = scalar_select %p77, %s78, %s79
      %p83 = pneg %p77
      %p84 = scmp.eq.s32.totalorder %s16, 1
      %p85 = por %p83, %p84
      %p86 = scmp.ne.s32.totalorder %s78, %s81
      %p87 = scmp.eq.s32.totalorder %s16, 0
      %p88 = por %p86, %p87
      %p89 = scmp.ne.s32.totalorder %s78, %s81
      %p90 = scmp.eq.s32.totalorder %s21, 1
      %p91 = por %p89, %p90
      %p92 = scmp.ne.s32.totalorder %s81, %s82
      %p93 = scmp.eq.s32.totalorder %s21, 0
      %p94 = por %p92, %p93
      %p95 = scmp.ne.s32.totalorder %s81, %s82
      %p96 = scmp.eq.s32.totalorder %s22, 1
      %p97 = por %p95, %p96
      %p99 = scmp.ne.s32.totalorder %s82, %s98
      %p100 = scmp.eq.s32.totalorder %s22, 0
      %p101 = por %p99, %p100
      %s103 = sadd.s32 %s102, 1
      %p106 = scmp.eq.s32.totalorder %s16, 1
      %p107 = scmp.ne.s32.totalorder %s102, %s104
      %p108 = scmp.eq.s32.totalorder %s16, 0
      %p109 = por %p107, %p108
      %p110 = scmp.ne.s32.totalorder %s102, %s104
      %p111 = scmp.eq.s32.totalorder %s21, 1
      %p112 = por %p110, %p111
      %p113 = scmp.ne.s32.totalorder %s104, %s105
      %p114 = scmp.eq.s32.totalorder %s21, 0
      %p115 = por %p113, %p114
      %p116 = scmp.ne.s32.totalorder %s104, %s105
      %p117 = scmp.eq.s32.totalorder %s22, 1
      %p118 = por %p116, %p117
      %p120 = scmp.ne.s32.totalorder %s105, %s119
      %p121 = scmp.eq.s32.totalorder %s22, 0
      %p122 = por %p120, %p121
      %s124 = sadd.s32 %s123, 1
      %p127 = scmp.eq.s32.totalorder %s16, 1
      %p128 = scmp.ne.s32.totalorder %s123, %s125
      %p129 = scmp.eq.s32.totalorder %s16, 0
      %p130 = por %p128, %p129
      %p131 = scmp.ne.s32.totalorder %s123, %s125
      %p132 = scmp.eq.s32.totalorder %s21, 1
      %p133 = por %p131, %p132
      %p134 = scmp.ne.s32.totalorder %s125, %s126
      %p135 = scmp.eq.s32.totalorder %s21, 0
      %p136 = por %p134, %p135
      %p137 = scmp.ne.s32.totalorder %s125, %s126
      %p138 = scmp.eq.s32.totalorder %s22, 1
      %p139 = por %p137, %p138
      %p141 = scmp.ne.s32.totalorder %s126, %s140
      %p142 = scmp.eq.s32.totalorder %s22, 0
      %p143 = por %p141, %p142
      %s145 = sadd.s32 %s144, 1
      %p148 = scmp.eq.s32.totalorder %s16, 1
      %p149 = scmp.ne.s32.totalorder %s144, %s146
      %p150 = scmp.eq.s32.totalorder %s16, 0
      %p151 = por %p149, %p150
      %p152 = scmp.ne.s32.totalorder %s144, %s146
      %p153 = scmp.eq.s32.totalorder %s21, 1
      %p154 = por %p152, %p153
      %p155 = scmp.ne.s32.totalorder %s146, %s147
      %p156 = scmp.eq.s32.totalorder %s21, 0
      %p157 = por %p155, %p156
      %p158 = scmp.ne.s32.totalorder %s146, %s147
      %p159 = scmp.eq.s32.totalorder %s22, 1
      %p160 = por %p158, %p159
      %p162 = scmp.ne.s32.totalorder %s147, %s161
      %p163 = scmp.eq.s32.totalorder %s22, 0
      %p164 = por %p162, %p163
      %s166 = sadd.s32 %s165, 1
      %p169 = scmp.eq.s32.totalorder %s16, 1
      %p170 = scmp.ne.s32.totalorder %s165, %s167
      %p171 = scmp.eq.s32.totalorder %s16, 0
      %p172 = por %p170, %p171
      %p173 = scmp.ne.s32.totalorder %s165, %s167
      %p174 = scmp.eq.s32.totalorder %s21, 1
      %p175 = por %p173, %p174
      %p176 = scmp.ne.s32.totalorder %s167, %s168
      %p177 = scmp.eq.s32.totalorder %s21, 0
      %p178 = por %p176, %p177
      %p179 = scmp.ne.s32.totalorder %s167, %s168
      %p180 = scmp.eq.s32.totalorder %s22, 1
      %p181 = por %p179, %p180
      %p183 = scmp.ne.s32.totalorder %s168, %s182
      %p184 = scmp.eq.s32.totalorder %s22, 0
      %p185 = por %p183, %p184
      %s186 = ssub.s32 %s16, %s23
      %p187 = scmp.eq.s32.totalorder %s186, 0
      %s189 = sadd.s32 %s188, 1
      %s190 = scalar_select %p187, %s188, %s189
      %p193 = pneg %p187
      %p194 = scmp.eq.s32.totalorder %s16, 1
      %p195 = por %p193, %p194
      %p196 = scmp.ne.s32.totalorder %s188, %s191
      %p197 = scmp.eq.s32.totalorder %s16, 0
      %p198 = por %p196, %p197
      %p199 = scmp.ne.s32.totalorder %s188, %s191
      %p200 = scmp.eq.s32.totalorder %s21, 1
      %p201 = por %p199, %p200
      %p202 = scmp.ne.s32.totalorder %s191, %s192
      %p203 = scmp.eq.s32.totalorder %s21, 0
      %p204 = por %p202, %p203
      %p205 = scmp.ne.s32.totalorder %s191, %s192
      %p206 = scmp.eq.s32.totalorder %s22, 1
      %p207 = por %p205, %p206
      %p209 = scmp.ne.s32.totalorder %s192, %s208
      %p210 = scmp.eq.s32.totalorder %s22, 0
      %p211 = por %p209, %p210
      %p212 = scmp.le.s32.totalorder 1, %s16
      %p213 = scmp.lt.s32.totalorder %s16, 3
      %p214 = pnand %p212, %p213
      %p215 = pneg %p214
      // Predicated region
      $region9: #{tpu_custom_call.1} parent=5 // pred_check
        _
      $region10: #{tpu_custom_call.1} parent=5 // pred_check_branch
        %217 = sbr.rel (%p214) target = $region12
      $region11: #{tpu_custom_call.1} parent=5 // pred_region
        %s218 = ssub.s32 %s16, 1
        // Predicated region
        $region13: #{tpu_custom_call.1} parent=11 // pred_check
          %p219 = pneg %p115
        $region14: #{tpu_custom_call.1} parent=11 // pred_check_branch
          %221 = sbr.rel (%p219) target = $region16
        $region15: #{tpu_custom_call.1} parent=11 // pred_region
          _
        $region16: #{tpu_custom_call.1} parent=11 // pred_fallthru
          _
        // Predicated region
        $region17: #{tpu_custom_call.1} parent=11 // pred_check
          %p222 = pneg %p136
        $region18: #{tpu_custom_call.1} parent=11 // pred_check_branch
          %224 = sbr.rel (%p222) target = $region20
        $region19: #{tpu_custom_call.1} parent=11 // pred_region
          _
        $region20: #{tpu_custom_call.1} parent=11 // pred_fallthru
          _
        // Predicated region
        $region21: #{tpu_custom_call.1} parent=11 // pred_check
          %p225 = pneg %p157
        $region22: #{tpu_custom_call.1} parent=11 // pred_check_branch
          %227 = sbr.rel (%p225) target = $region24
        $region23: #{tpu_custom_call.1} parent=11 // pred_region
          _
        $region24: #{tpu_custom_call.1} parent=11 // pred_fallthru
          _
        // Predicated region
        $region25: #{tpu_custom_call.1} parent=11 // pred_check
          %p228 = pneg %p178
        $region26: #{tpu_custom_call.1} parent=11 // pred_check_branch
          %230 = sbr.rel (%p228) target = $region28
        $region27: #{tpu_custom_call.1} parent=11 // pred_region
          _
        $region28: #{tpu_custom_call.1} parent=11 // pred_fallthru
          _
      $region12: #{tpu_custom_call.1} parent=5 // pred_fallthru
        _
      %p231 = scmp.lt.s32.totalorder %s16, 2
      // Predicated region
      $region29: #{tpu_custom_call.1} parent=5 // pred_check
        %p232 = pneg %p231
      $region30: #{tpu_custom_call.1} parent=5 // pred_check_branch
        %234 = sbr.rel (%p232) target = $region32
      $region31: #{tpu_custom_call.1} parent=5 // pred_region
        // Predicated region
        $region33: #{tpu_custom_call.1} parent=31 // pred_check
          %p235 = pneg %p36
        $region34: #{tpu_custom_call.1} parent=31 // pred_check_branch
          %237 = sbr.rel (%p235) target = $region36
        $region35: #{tpu_custom_call.1} parent=31 // pred_region
          %s238 = smul.u32 4, %s16
          %p239 = scmp.lt.s32.totalorder %s238, 7
          %s240 = scalar_select %p239, %s238, 7
          %s241 = smul.addr %s240, 8
          %s242 = scalar_lea.vmem %s0, %s241
          %s243 = smul.u32 4, %s16
        $region36: #{tpu_custom_call.1} parent=31 // pred_fallthru
          _
        // Predicated region
        $region37: #{tpu_custom_call.1} parent=31 // pred_check
          %p244 = pneg %p62
        $region38: #{tpu_custom_call.1} parent=31 // pred_check_branch
          %246 = sbr.rel (%p244) target = $region40
        $region39: #{tpu_custom_call.1} parent=31 // pred_region
          %s247 = smul.u32 4, %s16
          %p248 = scmp.lt.s32.totalorder %s247, 7
          %s249 = scalar_select %p248, %s247, 7
          %s250 = smul.addr %s249, 2
          %s251 = smul.addr %s250, 8
          %s252 = scalar_lea.vmem %s1, %s251
          %s253 = smul.u32 4, %s16
        $region40: #{tpu_custom_call.1} parent=31 // pred_fallthru
          _
        // Predicated region
        $region41: #{tpu_custom_call.1} parent=31 // pred_check
          %p254 = pneg %p88
        $region42: #{tpu_custom_call.1} parent=31 // pred_check_branch
          %256 = sbr.rel (%p254) target = $region44
        $region43: #{tpu_custom_call.1} parent=31 // pred_region
          %s257 = smul.u32 4, %s16
          %p258 = scmp.lt.s32.totalorder %s257, 7
          %s259 = scalar_select %p258, %s257, 7
          %s260 = smul.addr %s259, 2
          %s261 = scalar_lea.vmem %s2, %s260
          %s262 = smul.u32 4, %s16
        $region44: #{tpu_custom_call.1} parent=31 // pred_fallthru
          _
      $region32: #{tpu_custom_call.1} parent=5 // pred_fallthru
        _
      %p263 = scmp.le.s32.totalorder 1, %s16
      %p264 = scmp.lt.s32.totalorder %s16, 3
      %p265 = pnand %p263, %p264
      %p266 = pneg %p265
      // Predicated region
      $region45: #{tpu_custom_call.1} parent=5 // pred_check
        _
      $region46: #{tpu_custom_call.1} parent=5 // pred_check_branch
        %268 = sbr.rel (%p265) target = $region48
      $region47: #{tpu_custom_call.1} parent=5 // pred_region
        %s269 = ssub.s32 %s16, 1
        %s270 = smul.u32 4, %s21
        %p271 = scmp.lt.s32.totalorder %s270, 7
        %s272 = scalar_select %p271, %s270, 7
        %s273 = smul.addr %s272, 8
        %s274 = scalar_lea.vmem %s0, %s273
        %p275 = pneg %p42
        %p276 = pneg %p39
        %s277 = smul.u32 4, %s21
        %p278 = scmp.lt.s32.totalorder %s277, 7
        %s279 = scalar_select %p278, %s277, 7
        %s280 = smul.addr %s279, 2
        %s281 = smul.addr %s280, 8
        %s282 = scalar_lea.vmem %s1, %s281
        %p283 = pneg %p68
        %p284 = pneg %p65
        %s285 = smul.u32 4, %s21
        %p286 = scmp.lt.s32.totalorder %s285, 7
        %s287 = scalar_select %p286, %s285, 7
        %s288 = smul.addr %s287, 2
        %s289 = scalar_lea.vmem %s2, %s288
        %p290 = pneg %p94
        %p291 = pneg %p91
        %p292 = pneg %p115
        %p293 = pneg %p112
        %p294 = pneg %p136
        %p295 = pneg %p133
        %p296 = pneg %p157
        %p297 = pneg %p154
        %p298 = pneg %p178
        %p299 = pneg %p175
        %p300 = pneg %p204
        %p301 = pneg %p201
        %s302 = sand.u32 %s191, 1
        %s303 = scalar_lea.sflag [#allocation3], %s302
        %s304 = sand.u32 %s191, 1
        %s305 = smul.addr %s304, 32
        %s306 = scalar_lea.vmem [#allocation2], %s305
        %s307 = smul.u32 4, %s21
        %p308 = scmp.lt.s32.totalorder %s307, 7
        %s309 = scalar_select %p308, %s307, 7
        %s310 = smul.addr %s309, 8
        %s311 = scalar_lea.vmem %s0, %s310
        %s312 = smul.u32 4, %s21
        %s313 = smul.u32 4, %s21
        %p314 = scmp.lt.s32.totalorder %s313, 7
        %s315 = scalar_select %p314, %s313, 7
        %s316 = smul.addr %s315, 2
        %s317 = smul.addr %s316, 8
        %s318 = scalar_lea.vmem %s1, %s317
        %s319 = smul.u32 4, %s21
        %s320 = smul.u32 4, %s21
        %p321 = scmp.lt.s32.totalorder %s320, 7
        %s322 = scalar_select %p321, %s320, 7
        %s323 = smul.addr %s322, 2
        %s324 = scalar_lea.vmem %s2, %s323
        %s325 = smul.u32 4, %s21
        %s326 = smul.u32 4, %s21
        %v329 = vld [vmem:[%s311] sm:$0xff]
        %v330 = vld [vmem:[%s311 + $0x8] sm:$0xff]
        %v331 = vld [vmem:[%s311 + $0x10] sm:$0xff]
        %v332 = vld [vmem:[%s311 + $0x18] sm:$0xff]
        %v333 = vld [vmem:[%s3] sm:$0xff]
        %v334 = vld [vmem:[%s3 + $0x8] sm:$0xff]
        %v335 = vld [vmem:[%s3 + $0x10] sm:$0xff]
        %v336 = vld [vmem:[%s3 + $0x18] sm:$0xff]
        %v337 = vld [vmem:[%s4] sm:$0x1]
        %v339 = vlaneseq
        %v340 = vshrl.u32 %v339, 7
        %v341 = vsub.s32 0, %v340
        %v342 = vrot.slane %v337, %v341
        %vm344 = vcmask 261120
        %v346 = vsel %vm344, %v329, 0
        %v349 = vsel %vm344, %v330, 0
        %v352 = vsel %vm344, %v331, 0
        %v355 = vsel %vm344, %v332, 0
        %357 = vmatprep.subr.mxu0 0.0
        %358 = vmatpush1.msra.mxu0 0.0
        %359 = vmatprep.subr.mxu0 0.0
        %360 = vmatpush1.msra.mxu0 0.0
        %361 = vmatprep.subr.mxu0 0.0
        %362 = vmatpush1.msra.mxu0 0.0
        %363 = vmatprep.subr.mxu0 0.0
        %364 = vmatpush1.msra.mxu0 0.0
        %365 = vmatprep.subr.mxu0 0.0
        %366 = vmatpush1.msra.mxu0 0.0
        %367 = vmatprep.subr.mxu0 0.0
        %368 = vmatpush1.msra.mxu0 0.0
        %369 = vmatprep.subr.mxu0 0.0
        %370 = vmatpush1.msra.mxu0 0.0
        %371 = vmatprep.subr.mxu0 0.0
        %372 = vmatpush1.msra.mxu0 0.0
        %373 = vmatprep.subr.mxu0 0.0
        %374 = vmatpush1.msra.mxu0 0.0
        %375 = vmatprep.subr.mxu0 0.0
        %376 = vmatpush1.msra.mxu0 0.0
        %377 = vmatprep.subr.mxu0 0.0
        %378 = vmatpush1.msra.mxu0 0.0
        %379 = vmatprep.subr.mxu0 0.0
        %380 = vmatpush1.msra.mxu0 0.0
        %381 = vmatprep.subr.mxu0 0.0
        %382 = vmatpush1.msra.mxu0 %v336
        %383 = vmatprep.subr.mxu0 0.0
        %384 = vmatpush1.msra.mxu0 %v335
        %385 = vmatprep.subr.mxu0 0.0
        %386 = vmatpush1.msra.mxu0 %v334
        %387 = vmatprep.subr.mxu0 0.0
        %388 = vmatpush1.msra.mxu0 %v333
        %389 = vmatprep.subr.mxu0 0.0
        %390 = vmatpush2.msra.mxu0 0.0
        %391 = vmatprep.subr.mxu0 0.0
        %392 = vmatpush2.msra.mxu0 0.0
        %393 = vmatprep.subr.mxu0 0.0
        %394 = vmatpush2.msra.mxu0 0.0
        %395 = vmatprep.subr.mxu0 0.0
        %396 = vmatpush2.msra.mxu0 0.0
        %397 = vmatprep.subr.mxu0 0.0
        %398 = vmatpush2.msra.mxu0 0.0
        %399 = vmatprep.subr.mxu0 0.0
        %400 = vmatpush2.msra.mxu0 0.0
        %401 = vmatprep.subr.mxu0 0.0
        %402 = vmatpush2.msra.mxu0 0.0
        %403 = vmatprep.subr.mxu0 0.0
        %404 = vmatpush2.msra.mxu0 0.0
        %405 = vmatprep.subr.mxu0 0.0
        %406 = vmatpush2.msra.mxu0 0.0
        %407 = vmatprep.subr.mxu0 0.0
        %408 = vmatpush2.msra.mxu0 0.0
        %409 = vmatprep.subr.mxu0 0.0
        %410 = vmatpush2.msra.mxu0 0.0
        %411 = vmatprep.subr.mxu0 0.0
        %412 = vmatpush2.msra.mxu0 0.0
        %413 = vmatprep.subr.mxu0 0.0
        %414 = vmatpush2.msra.mxu0 0.0
        %415 = vmatprep.subr.mxu0 0.0
        %416 = vmatpush2.msra.mxu0 0.0
        %417 = vmatprep.subr.mxu0 0.0
        %418 = vmatpush2.msra.mxu0 0.0
        %419 = vmatprep.subr.mxu0 0.0
        %420 = vmatpush2.msra.mxu0 0.0
        %421 = vmatprep.mubr.f32.mxu0 0.0
        %422 = vmatmul.mubr.f32.gmra.mxu0 %v346
        %v423 = vpop.f32.mrf.mxu0
        %v424 = vadd.f32 %v342, %v423
        %v425 = vpop.f32.mrf.mxu0
        %426 = vmatprep.mubr.f32.mxu0 0.0
        %427 = vmatmul.mubr.f32.gmra.mxu0 %v349
        %v428 = vpop.f32.mrf.mxu0
        %v429 = vadd.f32 %v342, %v428
        %v430 = vpop.f32.mrf.mxu0
        %431 = vmatprep.mubr.f32.mxu0 0.0
        %432 = vmatmul.mubr.f32.gmra.mxu0 %v352
        %v433 = vpop.f32.mrf.mxu0
        %v434 = vadd.f32 %v342, %v433
        %v435 = vpop.f32.mrf.mxu0
        %436 = vmatprep.mubr.f32.mxu0 0.0
        %437 = vmatmul.mubr.f32.gmra.mxu0 %v355
        %v438 = vpop.f32.mrf.mxu0
        %v439 = vadd.f32 %v342, %v438
        %v440 = vpop.f32.mrf.mxu0
        %441 = vdwg.mxu0
        %v442 = vld [vmem:[%s318] sm:$0xff]
        %v443 = vld [vmem:[%s318 + $0x8] sm:$0xff]
        %v444 = vld [vmem:[%s318 + $0x10] sm:$0xff]
        %v445 = vld [vmem:[%s318 + $0x18] sm:$0xff]
        %v446 = vld [vmem:[%s318 + $0x20] sm:$0xff]
        %v447 = vld [vmem:[%s318 + $0x28] sm:$0xff]
        %v448 = vld [vmem:[%s318 + $0x30] sm:$0xff]
        %v449 = vld [vmem:[%s318 + $0x38] sm:$0xff]
        %v450 = vld [vmem:[%s5] sm:$0x1]
        %452 = vset.pattern.permute.xlu0 0
        %453 = vperm.xlu0 %452, %v442
        %v454 = vpop.permute.xlu0 %453
        %457 = vset.pattern.permute.xlu0 0
        %458 = vperm.xlu0 %457, %v443
        %v459 = vpop.permute.xlu0 %458
        %462 = vset.pattern.permute.xlu0 0
        %463 = vperm.xlu0 %462, %v444
        %v464 = vpop.permute.xlu0 %463
        %467 = vset.pattern.permute.xlu0 0
        %468 = vperm.xlu0 %467, %v445
        %v469 = vpop.permute.xlu0 %468
        %472 = vset.pattern.permute.xlu0 0
        %473 = vperm.xlu0 %472, %v446
        %v474 = vpop.permute.xlu0 %473
        %477 = vset.pattern.permute.xlu0 0
        %478 = vperm.xlu0 %477, %v447
        %v479 = vpop.permute.xlu0 %478
        %482 = vset.pattern.permute.xlu0 0
        %483 = vperm.xlu0 %482, %v448
        %v484 = vpop.permute.xlu0 %483
        %487 = vset.pattern.permute.xlu0 0
        %488 = vperm.xlu0 %487, %v449
        %v489 = vpop.permute.xlu0 %488
        %v491 = vlaneseq
        %v492 = vshrl.u32 %v491, 7
        %v493 = vsub.s32 0, %v492
        %v494 = vrot.slane %v450, %v493
        %v495 = vmul.f32 %v454, %v494
        %v496 = vmul.f32 %v459, %v494
        %v497 = vmul.f32 %v464, %v494
        %v498 = vmul.f32 %v469, %v494
        %v499 = vmul.f32 %v474, %v494
        %v500 = vmul.f32 %v479, %v494
        %v501 = vmul.f32 %v484, %v494
        %v502 = vmul.f32 %v489, %v494
        %v503 = vld [vmem:[%s5 + $0x1] sm:$0x1]
        %504 = vset.pattern.permute.xlu0 1
        %505 = vperm.xlu0 %504, %v442
        %v506 = vpop.permute.xlu0 %505
        %508 = vset.pattern.permute.xlu0 1
        %509 = vperm.xlu0 %508, %v443
        %v510 = vpop.permute.xlu0 %509
        %512 = vset.pattern.permute.xlu0 1
        %513 = vperm.xlu0 %512, %v444
        %v514 = vpop.permute.xlu0 %513
        %516 = vset.pattern.permute.xlu0 1
        %517 = vperm.xlu0 %516, %v445
        %v518 = vpop.permute.xlu0 %517
        %520 = vset.pattern.permute.xlu0 1
        %521 = vperm.xlu0 %520, %v446
        %v522 = vpop.permute.xlu0 %521
        %524 = vset.pattern.permute.xlu0 1
        %525 = vperm.xlu0 %524, %v447
        %v526 = vpop.permute.xlu0 %525
        %528 = vset.pattern.permute.xlu0 1
        %529 = vperm.xlu0 %528, %v448
        %v530 = vpop.permute.xlu0 %529
        %532 = vset.pattern.permute.xlu0 1
        %533 = vperm.xlu0 %532, %v449
        %v534 = vpop.permute.xlu0 %533
        %v536 = vlaneseq
        %v537 = vshrl.u32 %v536, 7
        %v538 = vsub.s32 0, %v537
        %v539 = vrot.slane %v503, %v538
        %v540 = vmul.f32 %v506, %v539
        %v541 = vmul.f32 %v510, %v539
        %v542 = vmul.f32 %v514, %v539
        %v543 = vmul.f32 %v518, %v539
        %v544 = vmul.f32 %v522, %v539
        %v545 = vmul.f32 %v526, %v539
        %v546 = vmul.f32 %v530, %v539
        %v547 = vmul.f32 %v534, %v539
        %v548 = vadd.f32 %v495, %v540
        %v549 = vadd.f32 %v496, %v541
        %v550 = vadd.f32 %v497, %v542
        %v551 = vadd.f32 %v498, %v543
        %v552 = vadd.f32 %v499, %v544
        %v553 = vadd.f32 %v500, %v545
        %v554 = vadd.f32 %v501, %v546
        %v555 = vadd.f32 %v502, %v547
        %v556 = vld [vmem:[%s6] sm:$0x1]
        %v558 = vlaneseq
        %v559 = vshrl.u32 %v558, 7
        %v560 = vsub.s32 0, %v559
        %v561 = vrot.slane %v556, %v560
        %v563 = vadd.f32 %v548, %v561
        %v564 = vadd.f32 %v549, %v561
        %v565 = vadd.f32 %v550, %v561
        %v566 = vadd.f32 %v551, %v561
        %v567 = vadd.f32 %v552, %v561
        %v568 = vadd.f32 %v553, %v561
        %v569 = vadd.f32 %v554, %v561
        %v570 = vadd.f32 %v555, %v561
        %v572 = vsel %vm344, %v424, 0
        %v575 = vsel %vm344, %v563, 0
        %v578 = vsel %vm344, %v564, 0
        %580 = vmatprep.subr.mxu0 0.0
        %581 = vmatpush1.xpose.msra.mxu0 0.0
        %582 = vmatprep.subr.mxu0 0.0
        %583 = vmatpush1.xpose.msra.mxu0 0.0
        %584 = vmatprep.subr.mxu0 0.0
        %585 = vmatpush1.xpose.msra.mxu0 0.0
        %586 = vmatprep.subr.mxu0 0.0
        %587 = vmatpush1.xpose.msra.mxu0 0.0
        %588 = vmatprep.subr.mxu0 0.0
        %589 = vmatpush1.xpose.msra.mxu0 0.0
        %590 = vmatprep.subr.mxu0 0.0
        %591 = vmatpush1.xpose.msra.mxu0 0.0
        %592 = vmatprep.subr.mxu0 0.0
        %593 = vmatpush1.xpose.msra.mxu0 0.0
        %594 = vmatprep.subr.mxu0 0.0
        %595 = vmatpush1.xpose.msra.mxu0 0.0
        %596 = vmatprep.subr.mxu0 0.0
        %597 = vmatpush1.xpose.msra.mxu0 0.0
        %598 = vmatprep.subr.mxu0 0.0
        %599 = vmatpush1.xpose.msra.mxu0 0.0
        %600 = vmatprep.subr.mxu0 0.0
        %601 = vmatpush1.xpose.msra.mxu0 0.0
        %602 = vmatprep.subr.mxu0 0.0
        %603 = vmatpush1.xpose.msra.mxu0 0.0
        %604 = vmatprep.subr.mxu0 0.0
        %605 = vmatpush1.xpose.msra.mxu0 0.0
        %606 = vmatprep.subr.mxu0 0.0
        %607 = vmatpush1.xpose.msra.mxu0 0.0
        %608 = vmatprep.subr.mxu0 0.0
        %609 = vmatpush1.xpose.msra.mxu0 %v578
        %610 = vmatprep.subr.mxu0 0.0
        %611 = vmatpush1.xpose.msra.mxu0 %v575
        %612 = vmatprep.subr.mxu0 0.0
        %613 = vmatpush2.xpose.msra.mxu0 0.0
        %614 = vmatprep.subr.mxu0 0.0
        %615 = vmatpush2.xpose.msra.mxu0 0.0
        %616 = vmatprep.subr.mxu0 0.0
        %617 = vmatpush2.xpose.msra.mxu0 0.0
        %618 = vmatprep.subr.mxu0 0.0
        %619 = vmatpush2.xpose.msra.mxu0 0.0
        %620 = vmatprep.subr.mxu0 0.0
        %621 = vmatpush2.xpose.msra.mxu0 0.0
        %622 = vmatprep.subr.mxu0 0.0
        %623 = vmatpush2.xpose.msra.mxu0 0.0
        %624 = vmatprep.subr.mxu0 0.0
        %625 = vmatpush2.xpose.msra.mxu0 0.0
        %626 = vmatprep.subr.mxu0 0.0
        %627 = vmatpush2.xpose.msra.mxu0 0.0
        %628 = vmatprep.subr.mxu0 0.0
        %629 = vmatpush2.xpose.msra.mxu0 0.0
        %630 = vmatprep.subr.mxu0 0.0
        %631 = vmatpush2.xpose.msra.mxu0 0.0
        %632 = vmatprep.subr.mxu0 0.0
        %633 = vmatpush2.xpose.msra.mxu0 0.0
        %634 = vmatprep.subr.mxu0 0.0
        %635 = vmatpush2.xpose.msra.mxu0 0.0
        %636 = vmatprep.subr.mxu0 0.0
        %637 = vmatpush2.xpose.msra.mxu0 0.0
        %638 = vmatprep.subr.mxu0 0.0
        %639 = vmatpush2.xpose.msra.mxu0 0.0
        %640 = vmatprep.subr.mxu0 0.0
        %641 = vmatpush2.xpose.msra.mxu0 0.0
        %642 = vmatprep.subr.mxu0 0.0
        %643 = vmatpush2.xpose.msra.mxu0 0.0
        %644 = vmatprep.mubr.f32.mxu0 0.0
        %645 = vmatmul.mubr.f32.gmra.mxu0 %v572
        %v646 = vpop.f32.mrf.mxu0
        %v647 = vadd.f32 0.0, %v646
        %v648 = vpop.f32.mrf.mxu0
        %649 = vdwg.mxu0
        %v651 = vsel %vm344, %v429, 0
        %v654 = vsel %vm344, %v565, 0
        %v657 = vsel %vm344, %v566, 0
        %659 = vmatprep.subr.mxu0 0.0
        %660 = vmatpush1.xpose.msra.mxu0 0.0
        %661 = vmatprep.subr.mxu0 0.0
        %662 = vmatpush1.xpose.msra.mxu0 0.0
        %663 = vmatprep.subr.mxu0 0.0
        %664 = vmatpush1.xpose.msra.mxu0 0.0
        %665 = vmatprep.subr.mxu0 0.0
        %666 = vmatpush1.xpose.msra.mxu0 0.0
        %667 = vmatprep.subr.mxu0 0.0
        %668 = vmatpush1.xpose.msra.mxu0 0.0
        %669 = vmatprep.subr.mxu0 0.0
        %670 = vmatpush1.xpose.msra.mxu0 0.0
        %671 = vmatprep.subr.mxu0 0.0
        %672 = vmatpush1.xpose.msra.mxu0 0.0
        %673 = vmatprep.subr.mxu0 0.0
        %674 = vmatpush1.xpose.msra.mxu0 0.0
        %675 = vmatprep.subr.mxu0 0.0
        %676 = vmatpush1.xpose.msra.mxu0 0.0
        %677 = vmatprep.subr.mxu0 0.0
        %678 = vmatpush1.xpose.msra.mxu0 0.0
        %679 = vmatprep.subr.mxu0 0.0
        %680 = vmatpush1.xpose.msra.mxu0 0.0
        %681 = vmatprep.subr.mxu0 0.0
        %682 = vmatpush1.xpose.msra.mxu0 0.0
        %683 = vmatprep.subr.mxu0 0.0
        %684 = vmatpush1.xpose.msra.mxu0 0.0
        %685 = vmatprep.subr.mxu0 0.0
        %686 = vmatpush1.xpose.msra.mxu0 0.0
        %687 = vmatprep.subr.mxu0 0.0
        %688 = vmatpush1.xpose.msra.mxu0 %v657
        %689 = vmatprep.subr.mxu0 0.0
        %690 = vmatpush1.xpose.msra.mxu0 %v654
        %691 = vmatprep.subr.mxu0 0.0
        %692 = vmatpush2.xpose.msra.mxu0 0.0
        %693 = vmatprep.subr.mxu0 0.0
        %694 = vmatpush2.xpose.msra.mxu0 0.0
        %695 = vmatprep.subr.mxu0 0.0
        %696 = vmatpush2.xpose.msra.mxu0 0.0
        %697 = vmatprep.subr.mxu0 0.0
        %698 = vmatpush2.xpose.msra.mxu0 0.0
        %699 = vmatprep.subr.mxu0 0.0
        %700 = vmatpush2.xpose.msra.mxu0 0.0
        %701 = vmatprep.subr.mxu0 0.0
        %702 = vmatpush2.xpose.msra.mxu0 0.0
        %703 = vmatprep.subr.mxu0 0.0
        %704 = vmatpush2.xpose.msra.mxu0 0.0
        %705 = vmatprep.subr.mxu0 0.0
        %706 = vmatpush2.xpose.msra.mxu0 0.0
        %707 = vmatprep.subr.mxu0 0.0
        %708 = vmatpush2.xpose.msra.mxu0 0.0
        %709 = vmatprep.subr.mxu0 0.0
        %710 = vmatpush2.xpose.msra.mxu0 0.0
        %711 = vmatprep.subr.mxu0 0.0
        %712 = vmatpush2.xpose.msra.mxu0 0.0
        %713 = vmatprep.subr.mxu0 0.0
        %714 = vmatpush2.xpose.msra.mxu0 0.0
        %715 = vmatprep.subr.mxu0 0.0
        %716 = vmatpush2.xpose.msra.mxu0 0.0
        %717 = vmatprep.subr.mxu0 0.0
        %718 = vmatpush2.xpose.msra.mxu0 0.0
        %719 = vmatprep.subr.mxu0 0.0
        %720 = vmatpush2.xpose.msra.mxu0 0.0
        %721 = vmatprep.subr.mxu0 0.0
        %722 = vmatpush2.xpose.msra.mxu0 0.0
        %723 = vmatprep.mubr.f32.mxu0 0.0
        %724 = vmatmul.mubr.f32.gmra.mxu0 %v651
        %v725 = vpop.f32.mrf.mxu0
        %v726 = vadd.f32 0.0, %v725
        %v727 = vpop.f32.mrf.mxu0
        %728 = vdwg.mxu0
        %v730 = vsel %vm344, %v434, 0
        %v733 = vsel %vm344, %v567, 0
        %v736 = vsel %vm344, %v568, 0
        %738 = vmatprep.subr.mxu0 0.0
        %739 = vmatpush1.xpose.msra.mxu0 0.0
        %740 = vmatprep.subr.mxu0 0.0
        %741 = vmatpush1.xpose.msra.mxu0 0.0
        %742 = vmatprep.subr.mxu0 0.0
        %743 = vmatpush1.xpose.msra.mxu0 0.0
        %744 = vmatprep.subr.mxu0 0.0
        %745 = vmatpush1.xpose.msra.mxu0 0.0
        %746 = vmatprep.subr.mxu0 0.0
        %747 = vmatpush1.xpose.msra.mxu0 0.0
        %748 = vmatprep.subr.mxu0 0.0
        %749 = vmatpush1.xpose.msra.mxu0 0.0
        %750 = vmatprep.subr.mxu0 0.0
        %751 = vmatpush1.xpose.msra.mxu0 0.0
        %752 = vmatprep.subr.mxu0 0.0
        %753 = vmatpush1.xpose.msra.mxu0 0.0
        %754 = vmatprep.subr.mxu0 0.0
        %755 = vmatpush1.xpose.msra.mxu0 0.0
        %756 = vmatprep.subr.mxu0 0.0
        %757 = vmatpush1.xpose.msra.mxu0 0.0
        %758 = vmatprep.subr.mxu0 0.0
        %759 = vmatpush1.xpose.msra.mxu0 0.0
        %760 = vmatprep.subr.mxu0 0.0
        %761 = vmatpush1.xpose.msra.mxu0 0.0
        %762 = vmatprep.subr.mxu0 0.0
        %763 = vmatpush1.xpose.msra.mxu0 0.0
        %764 = vmatprep.subr.mxu0 0.0
        %765 = vmatpush1.xpose.msra.mxu0 0.0
        %766 = vmatprep.subr.mxu0 0.0
        %767 = vmatpush1.xpose.msra.mxu0 %v736
        %768 = vmatprep.subr.mxu0 0.0
        %769 = vmatpush1.xpose.msra.mxu0 %v733
        %770 = vmatprep.subr.mxu0 0.0
        %771 = vmatpush2.xpose.msra.mxu0 0.0
        %772 = vmatprep.subr.mxu0 0.0
        %773 = vmatpush2.xpose.msra.mxu0 0.0
        %774 = vmatprep.subr.mxu0 0.0
        %775 = vmatpush2.xpose.msra.mxu0 0.0
        %776 = vmatprep.subr.mxu0 0.0
        %777 = vmatpush2.xpose.msra.mxu0 0.0
        %778 = vmatprep.subr.mxu0 0.0
        %779 = vmatpush2.xpose.msra.mxu0 0.0
        %780 = vmatprep.subr.mxu0 0.0
        %781 = vmatpush2.xpose.msra.mxu0 0.0
        %782 = vmatprep.subr.mxu0 0.0
        %783 = vmatpush2.xpose.msra.mxu0 0.0
        %784 = vmatprep.subr.mxu0 0.0
        %785 = vmatpush2.xpose.msra.mxu0 0.0
        %786 = vmatprep.subr.mxu0 0.0
        %787 = vmatpush2.xpose.msra.mxu0 0.0
        %788 = vmatprep.subr.mxu0 0.0
        %789 = vmatpush2.xpose.msra.mxu0 0.0
        %790 = vmatprep.subr.mxu0 0.0
        %791 = vmatpush2.xpose.msra.mxu0 0.0
        %792 = vmatprep.subr.mxu0 0.0
        %793 = vmatpush2.xpose.msra.mxu0 0.0
        %794 = vmatprep.subr.mxu0 0.0
        %795 = vmatpush2.xpose.msra.mxu0 0.0
        %796 = vmatprep.subr.mxu0 0.0
        %797 = vmatpush2.xpose.msra.mxu0 0.0
        %798 = vmatprep.subr.mxu0 0.0
        %799 = vmatpush2.xpose.msra.mxu0 0.0
        %800 = vmatprep.subr.mxu0 0.0
        %801 = vmatpush2.xpose.msra.mxu0 0.0
        %802 = vmatprep.mubr.f32.mxu0 0.0
        %803 = vmatmul.mubr.f32.gmra.mxu0 %v730
        %v804 = vpop.f32.mrf.mxu0
        %v805 = vadd.f32 0.0, %v804
        %v806 = vpop.f32.mrf.mxu0
        %807 = vdwg.mxu0
        %v809 = vsel %vm344, %v439, 0
        %v812 = vsel %vm344, %v569, 0
        %v815 = vsel %vm344, %v570, 0
        %817 = vmatprep.subr.mxu0 0.0
        %818 = vmatpush1.xpose.msra.mxu0 0.0
        %819 = vmatprep.subr.mxu0 0.0
        %820 = vmatpush1.xpose.msra.mxu0 0.0
        %821 = vmatprep.subr.mxu0 0.0
        %822 = vmatpush1.xpose.msra.mxu0 0.0
        %823 = vmatprep.subr.mxu0 0.0
        %824 = vmatpush1.xpose.msra.mxu0 0.0
        %825 = vmatprep.subr.mxu0 0.0
        %826 = vmatpush1.xpose.msra.mxu0 0.0
        %827 = vmatprep.subr.mxu0 0.0
        %828 = vmatpush1.xpose.msra.mxu0 0.0
        %829 = vmatprep.subr.mxu0 0.0
        %830 = vmatpush1.xpose.msra.mxu0 0.0
        %831 = vmatprep.subr.mxu0 0.0
        %832 = vmatpush1.xpose.msra.mxu0 0.0
        %833 = vmatprep.subr.mxu0 0.0
        %834 = vmatpush1.xpose.msra.mxu0 0.0
        %835 = vmatprep.subr.mxu0 0.0
        %836 = vmatpush1.xpose.msra.mxu0 0.0
        %837 = vmatprep.subr.mxu0 0.0
        %838 = vmatpush1.xpose.msra.mxu0 0.0
        %839 = vmatprep.subr.mxu0 0.0
        %840 = vmatpush1.xpose.msra.mxu0 0.0
        %841 = vmatprep.subr.mxu0 0.0
        %842 = vmatpush1.xpose.msra.mxu0 0.0
        %843 = vmatprep.subr.mxu0 0.0
        %844 = vmatpush1.xpose.msra.mxu0 0.0
        %845 = vmatprep.subr.mxu0 0.0
        %846 = vmatpush1.xpose.msra.mxu0 %v815
        %847 = vmatprep.subr.mxu0 0.0
        %848 = vmatpush1.xpose.msra.mxu0 %v812
        %849 = vmatprep.subr.mxu0 0.0
        %850 = vmatpush2.xpose.msra.mxu0 0.0
        %851 = vmatprep.subr.mxu0 0.0
        %852 = vmatpush2.xpose.msra.mxu0 0.0
        %853 = vmatprep.subr.mxu0 0.0
        %854 = vmatpush2.xpose.msra.mxu0 0.0
        %855 = vmatprep.subr.mxu0 0.0
        %856 = vmatpush2.xpose.msra.mxu0 0.0
        %857 = vmatprep.subr.mxu0 0.0
        %858 = vmatpush2.xpose.msra.mxu0 0.0
        %859 = vmatprep.subr.mxu0 0.0
        %860 = vmatpush2.xpose.msra.mxu0 0.0
        %861 = vmatprep.subr.mxu0 0.0
        %862 = vmatpush2.xpose.msra.mxu0 0.0
        %863 = vmatprep.subr.mxu0 0.0
        %864 = vmatpush2.xpose.msra.mxu0 0.0
        %865 = vmatprep.subr.mxu0 0.0
        %866 = vmatpush2.xpose.msra.mxu0 0.0
        %867 = vmatprep.subr.mxu0 0.0
        %868 = vmatpush2.xpose.msra.mxu0 0.0
        %869 = vmatprep.subr.mxu0 0.0
        %870 = vmatpush2.xpose.msra.mxu0 0.0
        %871 = vmatprep.subr.mxu0 0.0
        %872 = vmatpush2.xpose.msra.mxu0 0.0
        %873 = vmatprep.subr.mxu0 0.0
        %874 = vmatpush2.xpose.msra.mxu0 0.0
        %875 = vmatprep.subr.mxu0 0.0
        %876 = vmatpush2.xpose.msra.mxu0 0.0
        %877 = vmatprep.subr.mxu0 0.0
        %878 = vmatpush2.xpose.msra.mxu0 0.0
        %879 = vmatprep.subr.mxu0 0.0
        %880 = vmatpush2.xpose.msra.mxu0 0.0
        %881 = vmatprep.mubr.f32.mxu0 0.0
        %882 = vmatmul.mubr.f32.gmra.mxu0 %v809
        %v883 = vpop.f32.mrf.mxu0
        %v884 = vadd.f32 0.0, %v883
        %v885 = vpop.f32.mrf.mxu0
        %886 = vdwg.mxu0
        %v887 = vld [vmem:[%s324] sm:$0x3]
        %v888 = vld [vmem:[%s324 + $0x2] sm:$0x3]
        %v889 = vld [vmem:[%s324 + $0x4] sm:$0x3]
        %v890 = vld [vmem:[%s324 + $0x6] sm:$0x3]
        %vm891 = vnez %v887
        %vm892 = vnez %v888
        %vm893 = vnez %v889
        %vm894 = vnez %v890
        %v895 = vsel %vm891, 16843009, 0
        %v896 = vsel %vm892, 16843009, 0
        %v897 = vsel %vm893, 16843009, 0
        %v898 = vsel %vm894, 16843009, 0
        %v899 = vunpack.c.0.s8 %v895
        %v900 = vunpack.c.0.s8 %v896
        %v901 = vunpack.c.0.s8 %v897
        %v902 = vunpack.c.0.s8 %v898
        %vm903 = vcmp.ne.s32.totalorder %v899, 0
        %vm904 = vcmp.ne.s32.totalorder %v900, 0
        %vm905 = vcmp.ne.s32.totalorder %v901, 0
        %vm906 = vcmp.ne.s32.totalorder %v902, 0
        %v907 = vsel %vm903, -1e+12, %v647
        %v908 = vsel %vm904, -1e+12, %v726
        %v909 = vsel %vm905, -1e+12, %v805
        %v910 = vsel %vm906, -1e+12, %v884
        %vm911 = vcmask 130048
        %v912 = vsel %vm911, %v907, -inf
        %913 = vmax.xlane.f32.xlu0 %v912
        %v914 = vpop.xlane.xlu0 %913
        %v915 = vsel %vm911, %v908, -inf
        %916 = vmax.xlane.f32.xlu0 %v915
        %v917 = vpop.xlane.xlu0 %916
        %v918 = vsel %vm911, %v909, -inf
        %919 = vmax.xlane.f32.xlu0 %v918
        %v920 = vpop.xlane.xlu0 %919
        %v921 = vsel %vm911, %v910, -inf
        %922 = vmax.xlane.f32.xlu0 %v921
        %v923 = vpop.xlane.xlu0 %922
        %v924 = vsub.f32 %v907, %v914
        %v925 = vsub.f32 %v908, %v917
        %v926 = vsub.f32 %v909, %v920
        %v927 = vsub.f32 %v910, %v923
        %v928 = vmul.f32 %v924, 1.442695
        %v929 = vpow.pop %v928
        %v930 = vmul.f32 %v925, 1.442695
        %v931 = vpow.pop %v930
        %v932 = vmul.f32 %v926, 1.442695
        %v933 = vpow.pop %v932
        %v934 = vmul.f32 %v927, 1.442695
        %v935 = vpow.pop %v934
        %v936 = vsel %vm911, %v929, 0.0
        %937 = vadd.xlane.f32.xlu0 %v936
        %v938 = vpop.xlane.xlu0 %937
        %v939 = vsel %vm911, %v931, 0.0
        %940 = vadd.xlane.f32.xlu0 %v939
        %v941 = vpop.xlane.xlu0 %940
        %v942 = vsel %vm911, %v933, 0.0
        %943 = vadd.xlane.f32.xlu0 %v942
        %v944 = vpop.xlane.xlu0 %943
        %v945 = vsel %vm911, %v935, 0.0
        %946 = vadd.xlane.f32.xlu0 %v945
        %v947 = vpop.xlane.xlu0 %946
        %v948 = vrcp.pop %v938
        %v949 = vrcp.pop %v941
        %v950 = vrcp.pop %v944
        %v951 = vrcp.pop %v947
        %v952 = vmul.f32 %v929, %v948
        %v953 = vmul.f32 %v931, %v949
        %v954 = vmul.f32 %v933, %v950
        %v955 = vmul.f32 %v935, %v951
        %v956 = vsel %vm903, 0.0, %v952
        %v957 = vsel %vm904, 0.0, %v953
        %v958 = vsel %vm905, 0.0, %v954
        %v959 = vsel %vm906, 0.0, %v955
        %960 = vst.msk [vmem:[%s306] sm:$0xff] %vm911, %v956
        %961 = vst.msk [vmem:[%s306 + $0x8] sm:$0xff] %vm911, %v957
        %962 = vst.msk [vmem:[%s306 + $0x10] sm:$0xff] %vm911, %v958
        %963 = vst.msk [vmem:[%s306 + $0x18] sm:$0xff] %vm911, %v959
        %s964 = sand.u32 %s191, 1
        %s965 = scalar_lea.sflag [#allocation3], %s964
        %s966 = sand.u32 %s191, 1
        %s967 = smul.addr %s966, 32
        %s968 = scalar_lea.vmem [#allocation2], %s967
        // Predicated region
        $region49: #{tpu_custom_call.1} parent=47 // pred_check
          %p969 = pneg %p201
        $region50: #{tpu_custom_call.1} parent=47 // pred_check_branch
          %971 = sbr.rel (%p969) target = $region52
        $region51: #{tpu_custom_call.1} parent=47 // pred_region
          %s972 = smul.u32 4, %s21
          %s974 = ssub.s32 512, 512
          %975 = vsyncadd %s965, %s974
          %s976 = smul.addr %s972, 128
          %s977 = scalar_lea.hbm %s7, %s976
          %s978 = sshll.u32 %s968, 4
          %s979 = int_to_ptr.vmem [resolvable:$true] %s978
          %984 = dma.vmem_to_hbm [thread:$0]  %s979, 512, %s977, %s965, 128, 128, 8
        $region52: #{tpu_custom_call.1} parent=47 // pred_fallthru
          _
      $region48: #{tpu_custom_call.1} parent=5 // pred_fallthru
        _
      %p985 = scmp.le.s32.totalorder 2, %s16
      // Predicated region
      $region53: #{tpu_custom_call.1} parent=5 // pred_check
        %p986 = pneg %p985
      $region54: #{tpu_custom_call.1} parent=5 // pred_check_branch
        %988 = sbr.rel (%p986) target = $region56
      $region55: #{tpu_custom_call.1} parent=5 // pred_region
        %s989 = ssub.s32 %s16, 2
        // Predicated region
        $region57: #{tpu_custom_call.1} parent=55 // pred_check
          %p990 = pneg %p207
        $region58: #{tpu_custom_call.1} parent=55 // pred_check_branch
          %992 = sbr.rel (%p990) target = $region60
        $region59: #{tpu_custom_call.1} parent=55 // pred_region
          %s993 = sand.u32 %s192, 1
          %s994 = scalar_lea.sflag [#allocation3], %s993
          %s995 = sand.u32 %s192, 1
          %s996 = smul.addr %s995, 32
          %s997 = scalar_lea.vmem [#allocation2], %s996
          %998 = dma.done %s994, 512
        $region60: #{tpu_custom_call.1} parent=55 // pred_fallthru
          _
      $region56: #{tpu_custom_call.1} parent=5 // pred_fallthru
        _
    $region6: #{tpu_custom_call.1} parent=1 // loop_footer
      %s20 = sadd.s32 1, %s16
    $region7: #{tpu_custom_call.1} parent=1 // loop_footer_branch
      %15 = sbr.rel target = $region3
    $region8: #{tpu_custom_call.1} parent=1 // loop_exit
      _
    %999 = vsyncpa [#allocation3], 1
    %s1000 = scalar_lea.sflag [#allocation3], 1
    %1001 = vsyncpa %s1000, 1

</llo_original>
